<compile_context>
chip_gen: v7x
topology: tpu7x:2x2x1
jax: 0.10.0
libtpu: 0.0.40
codegen_flags: <defaults>
</compile_context>

<pallas_src>
import math

import numpy as np
import jax
import jax.numpy as jnp
from jax.experimental import pallas as pl
from jax.experimental.pallas import tpu as pltpu

_LANE = 128


def _round_up(x, mult):
    return ((x + mult - 1) // mult) * mult


def _vmem_capacity_bytes():
    """Per-core VMEM capacity; conservative 64 MiB (v7x) fallback."""
    try:
        return int(pltpu.get_tpu_info().vmem_capacity_bytes)
    except Exception:
        return 64 << 20


def _make_kernel(N, s, m):
    s = float(s)
    m = float(m)
    exp_neg_m_const = math.exp(-m)

    def kernel(more_ref, sid_r_ref, sid_c_ref, x1_ref, x2_ref,
               l12_ref, l21_ref, loss_ref, acc_ref):
        k = pl.program_id(0)

        @pl.when(k == 0)
        def _init():
            acc_ref[...] = jnp.zeros_like(acc_ref)

        # acc += x1_blk @ x2_blk.T  — single MXU matmul; sim21 is its transpose.
        # Both operands lane-dense (N, tk); contraction on dim 1 of both lowers
        # natively (flash-attention-style dnums), no per-step RHS transpose.
        dnums = (((1,), (1,)), ((), ()))
        acc_ref[...] += jax.lax.dot_general(
            x1_ref[...], x2_ref[...], dnums,
            preferred_element_type=jnp.float32)

        @pl.when(k == pl.num_programs(0) - 1)
        def _epilogue():
            s_f = jnp.float32(s)
            m_f = jnp.float32(m)
            inv_n = jnp.float32(1.0 / N)
            eps2 = jnp.float32(1e-24)        # (1e-12)^2, torch F.normalize eps
            exp_neg_m = jnp.float32(exp_neg_m_const)

            A = acc_ref[...]                 # (N, N) = x1 @ x2.T

            # Row / column inverse L2 norms of the single similarity matrix:
            #   x12        = A * inv_rn
            #   x21[i, j]  = (A * inv_cn)[j, i]
            inv_rn = jax.lax.rsqrt(
                jnp.maximum(jnp.sum(A * A, axis=1, keepdims=True), eps2))  # (N,1)
            inv_cn = jax.lax.rsqrt(
                jnp.maximum(jnp.sum(A * A, axis=0, keepdims=True), eps2))  # (1,N)

            more = more_ref[0] != 0          # resolved in the wrapper (SMEM)

            @pl.when(jnp.logical_not(more))
            def _unique():
                row = jax.lax.broadcasted_iota(jnp.int32, (N, N), 0)
                col = jax.lax.broadcasted_iota(jnp.int32, (N, N), 1)
                eye = row == col
                # diag(A) once, in both orientations (shared by L12 and L21).
                a_diag = jnp.where(eye, A, 0.0)
                diag_r = jnp.sum(a_diag, axis=1, keepdims=True)   # (N, 1)
                diag_c = jnp.sum(a_diag, axis=0, keepdims=True)   # (1, N)

                # ---- L12: per-row, max-stabilized (mathematically exact) ----
                X12 = A * inv_rn
                num12 = s_f * (diag_r * inv_rn - m_f)
                mx12 = jnp.maximum(num12,
                                   s_f * jnp.max(X12, axis=1, keepdims=True))
                off12 = jnp.sum(jnp.where(eye, 0.0, jnp.exp(s_f * X12 - mx12)),
                                axis=1, keepdims=True)
                L12 = num12 - mx12 - jnp.log(jnp.exp(num12 - mx12) + off12)
                l12_ref[...] = L12

                # ---- L21: per-column of B (X12 now dead) ----
                B = A * inv_cn
                num21 = s_f * (diag_c * inv_cn - m_f)
                mx21 = jnp.maximum(num21,
                                   s_f * jnp.max(B, axis=0, keepdims=True))
                off21 = jnp.sum(jnp.where(eye, 0.0, jnp.exp(s_f * B - mx21)),
                                axis=0, keepdims=True)
                L21 = num21 - mx21 - jnp.log(jnp.exp(num21 - mx21) + off21)
                l21_ref[...] = L21

                loss_ref[...] = -(jnp.sum(L12, keepdims=True) +
                                  jnp.sum(L21, keepdims=True)) * inv_n

            @pl.when(more)
            def _more():
                # Same-label mask built only where it is needed.
                maskf = (sid_r_ref[...] == sid_c_ref[...]).astype(jnp.float32)

                # ---- L12 ---- (s cancels: log(s*a) - log(s*b) = log a - log b)
                E12 = jnp.exp(A * inv_rn)
                tot12 = jnp.sum(E12, axis=1, keepdims=True)
                pos12 = jnp.sum(maskf * E12, axis=1, keepdims=True)
                p12 = exp_neg_m * pos12
                L12 = jnp.log(p12) - jnp.log(p12 + (tot12 - pos12))
                l12_ref[...] = L12

                # ---- L21 ---- (E12 now dead)
                E21 = jnp.exp(A * inv_cn)
                tot21 = jnp.sum(E21, axis=0, keepdims=True)
                pos21 = jnp.sum(maskf * E21, axis=0, keepdims=True)
                p21 = exp_neg_m * pos21
                L21 = jnp.log(p21) - jnp.log(p21 + (tot21 - pos21))
                l21_ref[...] = L21

                loss_ref[...] = -(jnp.sum(L12, keepdims=True) +
                                  jnp.sum(L21, keepdims=True)) * inv_n

    return kernel


def adm_softmax_loss(x1, x2, sentence_id, s=1.0, m=0.4,
                     compute_dtype=jnp.bfloat16, max_tk=None):
    """Pallas implementation of AdMSoftmaxLoss.forward.

    x1, x2: (N, D) arrays; sentence_id: (N,) int array.
    Returns (loss_scalar, L12 (N,), L21 (N,)).
    """
    x1 = jnp.asarray(x1)
    x2 = jnp.asarray(x2)
    N, D = x1.shape
    assert x2.shape == (N, D), "x1/x2 must share (N, D)"

    # ---- generation-aware VMEM budget ----
    cap = _vmem_capacity_bytes()
    vmem_target = int(cap * 0.78)            # ~48 MiB v7x, ~100 MiB v5e/v6e
    itemsize = jnp.dtype(compute_dtype).itemsize
    epi_bytes = 7 * N * N * 4                # acc + ~5 live (N,N) f32 epilogue temps
    overhead = 2 << 20
    min_chunk = 4 * N * _LANE * itemsize     # 2 inputs x 2 buffers x (N, 128)
    if epi_bytes + min_chunk + overhead > vmem_target:
        # TODO(synk): two-pass row/column-tiled variant for this regime.
        raise ValueError(
            f"AdMSoftmaxLoss Pallas kernel: N={N} does not fit the "
            f"{vmem_target >> 20} MiB VMEM budget of this TPU generation.")

    # ---- contraction tile: biggest lane-multiple chunk the budget allows ----
    headroom = vmem_target - epi_bytes - overhead
    tk_cap = max(_LANE, (headroom // (4 * N * itemsize)) // _LANE * _LANE)
    if max_tk is not None:
        tk_cap = max(_LANE, min(tk_cap, _round_up(int(max_tk), _LANE)))
    if D <= tk_cap:
        tk, kt, d_pad = D, 1, D              # single step, no padding needed
    else:
        tk = tk_cap
        d_pad = _round_up(D, tk)
        kt = d_pad // tk

    # bf16 inputs halve HBM traffic of the streaming phase; zero-padding the
    # remainder columns is exact for the matmul.
    x1c = x1.astype(compute_dtype)
    x2c = x2.astype(compute_dtype)
    if d_pad != D:
        pad = ((0, 0), (0, d_pad - D))
        x1c = jnp.pad(x1c, pad)
        x2c = jnp.pad(x2c, pad)

    sid = jnp.asarray(sentence_id).astype(jnp.int32).reshape(N)
    sid_row = sid.reshape(N, 1)
    sid_col = sid.reshape(1, N)
    # O(N log N) duplicate-label test in the wrapper (no (N,N) mask, no host sync).
    sid_sorted = jnp.sort(sid)
    more_flag = jnp.any(sid_sorted[1:] == sid_sorted[:-1]).astype(jnp.int32)
    more_flag = more_flag.reshape(1)

    kernel = _make_kernel(N, s, m)

    vmem_need = epi_bytes + 4 * N * tk * itemsize + overhead + 16 * N
    vmem_limit = int(min(max(vmem_need, 16 << 20), vmem_target))

    out_shapes = (
        jax.ShapeDtypeStruct((N, 1), jnp.float32),   # L12 (per-row)
        jax.ShapeDtypeStruct((1, N), jnp.float32),   # L21 (per-column, lane-dense)
        jax.ShapeDtypeStruct((1, 1), jnp.float32),   # loss
    )
    grid_spec = pltpu.PrefetchScalarGridSpec(
        num_scalar_prefetch=1,                       # `more` flag -> SMEM
        grid=(kt,),
        in_specs=[
            pl.BlockSpec((N, 1), lambda k, more: (0, 0)),    # sentence_id (col vec)
            pl.BlockSpec((1, N), lambda k, more: (0, 0)),    # sentence_id (row vec)
            pl.BlockSpec((N, tk), lambda k, more: (0, k)),   # x1, streamed over D
            pl.BlockSpec((N, tk), lambda k, more: (0, k)),   # x2, streamed over D
        ],
        out_specs=(
            pl.BlockSpec((N, 1), lambda k, more: (0, 0)),
            pl.BlockSpec((1, N), lambda k, more: (0, 0)),
            pl.BlockSpec((1, 1), lambda k, more: (0, 0)),
        ),
        scratch_shapes=[pltpu.VMEM((N, N), jnp.float32)],
    )
    l12, l21, loss = pl.pallas_call(
        kernel,
        out_shape=out_shapes,
        grid_spec=grid_spec,
        compiler_params=pltpu.CompilerParams(
            dimension_semantics=("arbitrary",),
            vmem_limit_bytes=vmem_limit),
    )(more_flag, sid_row, sid_col, x1c, x2c)

    return loss[0, 0], l12[:, 0], l21[0, :]


def _reference_numpy(x1, x2, sid, s=1.0, m=0.4):
    """Pure-numpy re-implementation of the PyTorch forward (float64)."""
    x1 = np.asarray(x1, np.float64)
    x2 = np.asarray(x2, np.float64)
    sid = np.asarray(sid)
    N = x1.shape[0]

    def norm_rows(a):
        n = np.maximum(np.linalg.norm(a, axis=1, keepdims=True), 1e-12)
        return a / n

    x12 = norm_rows(x1 @ x2.T)
    x21 = norm_rows(x2 @ x1.T)
    mask = sid[:, None] == sid[None, :]
    more = bool((mask.sum(axis=1) > 1).any())
    eye = np.eye(N, dtype=bool)

    def L(xm):
        if not more:
            num = s * (np.diag(xm) - m)
            off = np.where(eye, 0.0, np.exp(s * xm)).sum(axis=1)
            return num - np.log(np.exp(num) + off)
        else:
            pos = s * np.where(mask, np.exp(xm - m), 0.0).sum(axis=1)
            neg = s * np.where(mask, 0.0, np.exp(xm)).sum(axis=1)
            return np.log(pos) - np.log(pos + neg)

    L12 = L(x12)
    L21 = L(x21)
    return -(L12.mean() + L21.mean()), L12, L21


def _quantize_bf16(x):
    """Round-trip through bf16 so the f64 reference sees the kernel's inputs."""
    return np.asarray(jnp.asarray(x).astype(jnp.bfloat16).astype(jnp.float32),
                      dtype=np.float64)


if __name__ == "__main__":
    ok = True
    # (N, D, max_tk): default single-step, forced 3-step K grid, and an
    # indivisible-D case exercising the zero-padded remainder step.
    shape_cases = ((8, 384, None), (8, 384, 128), (8, 200, 128))
    for (N, D, max_tk) in shape_cases:
        key = jax.random.PRNGKey(0)
        k1, k2 = jax.random.split(key)
        x1 = jax.random.normal(k1, (N, D), dtype=jnp.float32)
        x2 = jax.random.normal(k2, (N, D), dtype=jnp.float32)

        sid_unique = jnp.arange(N, dtype=jnp.int32)                 # unique-label path
        sid_dup = jnp.asarray([0, 0, 1, 2, 3, 4, 5, 6], jnp.int32)  # more_label path

        cases = (
            (sid_unique, 1.0, 0.4, 1e-4),
            (sid_dup, 1.0, 0.4, 1e-4),
            (sid_unique, 30.0, 0.4, 5e-3),   # large s, exercises max-stabilization
        )
        x1q = _quantize_bf16(x1)
        x2q = _quantize_bf16(x2)
        for sid, s, m, tol in cases:
            loss, l12, l21 = adm_softmax_loss(x1, x2, sid, s=s, m=m, max_tk=max_tk)
            loss = jax.block_until_ready(loss)
            l12 = jax.block_until_ready(l12)
            l21 = jax.block_until_ready(l21)

            ref_loss, ref_l12, ref_l21 = _reference_numpy(
                x1q, x2q, np.asarray(sid), s=s, m=m)

            ok &= np.allclose(float(loss), ref_loss, rtol=tol, atol=tol)
            ok &= np.allclose(np.asarray(l12), ref_l12, rtol=tol, atol=tol)
            ok &= np.allclose(np.asarray(l21), ref_l21, rtol=tol, atol=tol)

    if not ok:
        raise AssertionError("Pallas kernel disagrees with reference")
    print("KERNEL_OK")
</pallas_src>

<mosaic_0001>
module attributes {stable_mosaic.version = 11 : i64} {
  func.func @kernel(%arg0: i32, %arg1: memref<1xi32, #tpu.memory_space<smem>>, %arg2: memref<8x1xi32, #tpu.memory_space<vmem>>, %arg3: memref<1x8xi32, #tpu.memory_space<vmem>>, %arg4: memref<8x384xbf16, #tpu.memory_space<vmem>>, %arg5: memref<8x384xbf16, #tpu.memory_space<vmem>>, %arg6: memref<8x1xf32, #tpu.memory_space<vmem>>, %arg7: memref<1x8xf32, #tpu.memory_space<vmem>>, %arg8: memref<1x1xf32, #tpu.memory_space<vmem>>, %arg9: memref<8x8xf32, #tpu.memory_space<vmem>>) attributes {dimension_semantics = [#tpu.dimension_semantics<arbitrary>], iteration_bounds = array<i64: 1>, scalar_prefetch = 1 : i64, scratch_operands = 1 : i64, tpu.core_type = #tpu.core_type<tc>, window_params = [{pipeline_mode = #tpu.pipeline_mode<synchronous>, transform_indices = @transform_0, window_bounds = array<i64: 8, 1>}, {pipeline_mode = #tpu.pipeline_mode<synchronous>, transform_indices = @transform_1, window_bounds = array<i64: 1, 8>}, {transform_indices = @transform_2, window_bounds = array<i64: 8, 384>}, {transform_indices = @transform_3, window_bounds = array<i64: 8, 384>}, {pipeline_mode = #tpu.pipeline_mode<synchronous>, transform_indices = @transform_4, window_bounds = array<i64: 8, 1>}, {pipeline_mode = #tpu.pipeline_mode<synchronous>, transform_indices = @transform_5, window_bounds = array<i64: 1, 8>}, {pipeline_mode = #tpu.pipeline_mode<synchronous>, transform_indices = @transform_6, window_bounds = array<i64: 1, 1>}]} {
    %c0_i32 = arith.constant 0 : i32
    %0 = arith.cmpi eq, %arg0, %c0_i32 : i32
    %1 = arith.extui %0 : i1 to i32
    %c0_i32_0 = arith.constant 0 : i32
    %2 = arith.cmpi ne, %1, %c0_i32_0 : i32
    scf.if %2 {
      %cst_10 = arith.constant 0.000000e+00 : f32
      %12 = vector.broadcast %cst_10 : f32 to vector<8x8xf32>
      %c0_11 = arith.constant 0 : index
      %c0_12 = arith.constant 0 : index
      %13 = vector.load %arg9[%c0_11, %c0_12] : memref<8x8xf32, #tpu.memory_space<vmem>>, vector<8x8xf32>
      tpu.vector_store %arg9[%c0_11, %c0_12], %12 {strides = array<i32>} : memref<8x8xf32, #tpu.memory_space<vmem>>, vector<8x8xf32>,
    } else {
    }
    %c0 = arith.constant 0 : index
    %c0_1 = arith.constant 0 : index
    %3 = vector.load %arg9[%c0, %c0_1] : memref<8x8xf32, #tpu.memory_space<vmem>>, vector<8x8xf32>
    %c0_2 = arith.constant 0 : index
    %c0_3 = arith.constant 0 : index
    %4 = vector.load %arg4[%c0_2, %c0_3] : memref<8x384xbf16, #tpu.memory_space<vmem>>, vector<8x384xbf16>
    %c0_4 = arith.constant 0 : index
    %c0_5 = arith.constant 0 : index
    %5 = vector.load %arg5[%c0_4, %c0_5] : memref<8x384xbf16, #tpu.memory_space<vmem>>, vector<8x384xbf16>
    %cst = arith.constant dense<0.000000e+00> : vector<8x8xf32>
    %6 = tpu.matmul %4, %5, %cst {dimension_numbers = #tpu.dot_dimension_numbers<[1], [1], [0], [0], [0, 0, 1, 0], [], []>} : vector<8x384xbf16>, vector<8x384xbf16>, vector<8x8xf32> -> vector<8x8xf32>
    %7 = arith.addf %3, %6 : vector<8x8xf32>
    %c0_6 = arith.constant 0 : index
    %c0_7 = arith.constant 0 : index
    %8 = vector.load %arg9[%c0_6, %c0_7] : memref<8x8xf32, #tpu.memory_space<vmem>>, vector<8x8xf32>
    tpu.vector_store %arg9[%c0_6, %c0_7], %7 {strides = array<i32>} : memref<8x8xf32, #tpu.memory_space<vmem>>, vector<8x8xf32>,
    %c0_i32_8 = arith.constant 0 : i32
    %9 = arith.cmpi eq, %arg0, %c0_i32_8 : i32
    %10 = arith.extui %9 : i1 to i32
    %c0_i32_9 = arith.constant 0 : i32
    %11 = arith.cmpi ne, %10, %c0_i32_9 : i32
    scf.if %11 {
      %c0_10 = arith.constant 0 : index
      %c0_11 = arith.constant 0 : index
      %12 = vector.load %arg9[%c0_10, %c0_11] : memref<8x8xf32, #tpu.memory_space<vmem>>, vector<8x8xf32>
      %13 = arith.mulf %12, %12 : vector<8x8xf32>
      %cst_12 = arith.constant dense<0.000000e+00> : vector<8xf32>
      %14 = vector.multi_reduction <add>, %13, %cst_12 [1] : vector<8x8xf32> to vector<8xf32>
      %15 = vector.shape_cast %14 : vector<8xf32> to vector<8x1xf32>
      %cst_13 = arith.constant 1.000000e-24 : f32
      %16 = vector.broadcast %cst_13 : f32 to vector<8x1xf32>
      %17 = arith.maximumf %15, %16 : vector<8x1xf32>
      %18 = math.rsqrt %17 : vector<8x1xf32>
      %19 = arith.mulf %12, %12 : vector<8x8xf32>
      %cst_14 = arith.constant dense<0.000000e+00> : vector<8xf32>
      %20 = vector.multi_reduction <add>, %19, %cst_14 [0] : vector<8x8xf32> to vector<8xf32>
      %21 = vector.shape_cast %20 : vector<8xf32> to vector<1x8xf32>
      %cst_15 = arith.constant 1.000000e-24 : f32
      %22 = vector.broadcast %cst_15 : f32 to vector<1x8xf32>
      %23 = arith.maximumf %21, %22 : vector<1x8xf32>
      %24 = math.rsqrt %23 : vector<1x8xf32>
      %c0_16 = arith.constant 0 : index
      %25 = memref.load %arg1[%c0_16] : memref<1xi32, #tpu.memory_space<smem>>
      %c0_i32_17 = arith.constant 0 : i32
      %26 = arith.cmpi ne, %25, %c0_i32_17 : i32
      %true = arith.constant true
      %27 = arith.xori %26, %true : i1
      %28 = arith.extui %27 : i1 to i32
      %cst_18 = arith.constant 4.000000e-01 : f32
      %cst_19 = arith.constant 1.000000e+00 : f32
      %cst_20 = arith.constant 1.250000e-01 : f32
      %c0_i32_21 = arith.constant 0 : i32
      %29 = arith.cmpi ne, %28, %c0_i32_21 : i32
      scf.if %29 {
        %32 = tpu.iota {dimensions = array<i32: 0>} : vector<8x8xi32>
        %33 = tpu.iota {dimensions = array<i32: 1>} : vector<8x8xi32>
        %34 = arith.cmpi eq, %32, %33 : vector<8x8xi32>
        %cst_25 = arith.constant 0.000000e+00 : f32
        %35 = vector.broadcast %cst_25 : f32 to vector<8x8xf32>
        %36 = arith.select %34, %12, %35 : vector<8x8xi1>, vector<8x8xf32>
        %cst_26 = arith.constant dense<0.000000e+00> : vector<8xf32>
        %37 = vector.multi_reduction <add>, %36, %cst_26 [1] : vector<8x8xf32> to vector<8xf32>
        %38 = vector.shape_cast %37 : vector<8xf32> to vector<8x1xf32>
        %cst_27 = arith.constant dense<0.000000e+00> : vector<8xf32>
        %39 = vector.multi_reduction <add>, %36, %cst_27 [0] : vector<8x8xf32> to vector<8xf32>
        %40 = vector.shape_cast %39 : vector<8xf32> to vector<1x8xf32>
        %41 = vector.broadcast %18 : vector<8x1xf32> to vector<8x8xf32>
        %42 = arith.mulf %12, %41 : vector<8x8xf32>
        %43 = arith.mulf %38, %18 : vector<8x1xf32>
        %44 = vector.broadcast %cst_18 : f32 to vector<8x1xf32>
        %45 = arith.subf %43, %44 : vector<8x1xf32>
        %46 = vector.broadcast %cst_19 : f32 to vector<8x1xf32>
        %47 = arith.mulf %46, %45 : vector<8x1xf32>
        %cst_28 = arith.constant dense<0xFF800000> : vector<8xf32>
        %48 = vector.multi_reduction <maximumf>, %42, %cst_28 [1] : vector<8x8xf32> to vector<8xf32>
        %49 = vector.shape_cast %48 : vector<8xf32> to vector<8x1xf32>
        %50 = vector.broadcast %cst_19 : f32 to vector<8x1xf32>
        %51 = arith.mulf %50, %49 : vector<8x1xf32>
        %52 = arith.maximumf %47, %51 : vector<8x1xf32>
        %53 = vector.broadcast %cst_19 : f32 to vector<8x8xf32>
        %54 = arith.mulf %53, %42 : vector<8x8xf32>
        %55 = vector.broadcast %52 : vector<8x1xf32> to vector<8x8xf32>
        %56 = arith.subf %54, %55 : vector<8x8xf32>
        %57 = math.exp %56 : vector<8x8xf32>
        %cst_29 = arith.constant 0.000000e+00 : f32
        %58 = vector.broadcast %cst_29 : f32 to vector<8x8xf32>
        %59 = arith.select %34, %58, %57 : vector<8x8xi1>, vector<8x8xf32>
        %cst_30 = arith.constant dense<0.000000e+00> : vector<8xf32>
        %60 = vector.multi_reduction <add>, %59, %cst_30 [1] : vector<8x8xf32> to vector<8xf32>
        %61 = vector.shape_cast %60 : vector<8xf32> to vector<8x1xf32>
        %62 = arith.subf %47, %52 : vector<8x1xf32>
        %63 = arith.subf %47, %52 : vector<8x1xf32>
        %64 = math.exp %63 : vector<8x1xf32>
        %65 = arith.addf %64, %61 : vector<8x1xf32>
        %66 = math.log %65 : vector<8x1xf32>
        %67 = arith.subf %62, %66 : vector<8x1xf32>
        %c0_31 = arith.constant 0 : index
        %c0_32 = arith.constant 0 : index
        %68 = vector.load %arg6[%c0_31, %c0_32] : memref<8x1xf32, #tpu.memory_space<vmem>>, vector<8x1xf32>
        tpu.vector_store %arg6[%c0_31, %c0_32], %67 {strides = array<i32>} : memref<8x1xf32, #tpu.memory_space<vmem>>, vector<8x1xf32>,
        %69 = vector.broadcast %24 : vector<1x8xf32> to vector<8x8xf32>
        %70 = arith.mulf %12, %69 : vector<8x8xf32>
        %71 = arith.mulf %40, %24 : vector<1x8xf32>
        %72 = vector.broadcast %cst_18 : f32 to vector<1x8xf32>
        %73 = arith.subf %71, %72 : vector<1x8xf32>
        %74 = vector.broadcast %cst_19 : f32 to vector<1x8xf32>
        %75 = arith.mulf %74, %73 : vector<1x8xf32>
        %cst_33 = arith.constant dense<0xFF800000> : vector<8xf32>
        %76 = vector.multi_reduction <maximumf>, %70, %cst_33 [0] : vector<8x8xf32> to vector<8xf32>
        %77 = vector.shape_cast %76 : vector<8xf32> to vector<1x8xf32>
        %78 = vector.broadcast %cst_19 : f32 to vector<1x8xf32>
        %79 = arith.mulf %78, %77 : vector<1x8xf32>
        %80 = arith.maximumf %75, %79 : vector<1x8xf32>
        %81 = vector.broadcast %cst_19 : f32 to vector<8x8xf32>
        %82 = arith.mulf %81, %70 : vector<8x8xf32>
        %83 = vector.broadcast %80 : vector<1x8xf32> to vector<8x8xf32>
        %84 = arith.subf %82, %83 : vector<8x8xf32>
        %85 = math.exp %84 : vector<8x8xf32>
        %cst_34 = arith.constant 0.000000e+00 : f32
        %86 = vector.broadcast %cst_34 : f32 to vector<8x8xf32>
        %87 = arith.select %34, %86, %85 : vector<8x8xi1>, vector<8x8xf32>
        %cst_35 = arith.constant dense<0.000000e+00> : vector<8xf32>
        %88 = vector.multi_reduction <add>, %87, %cst_35 [0] : vector<8x8xf32> to vector<8xf32>
        %89 = vector.shape_cast %88 : vector<8xf32> to vector<1x8xf32>
        %90 = arith.subf %75, %80 : vector<1x8xf32>
        %91 = arith.subf %75, %80 : vector<1x8xf32>
        %92 = math.exp %91 : vector<1x8xf32>
        %93 = arith.addf %92, %89 : vector<1x8xf32>
        %94 = math.log %93 : vector<1x8xf32>
        %95 = arith.subf %90, %94 : vector<1x8xf32>
        %c0_36 = arith.constant 0 : index
        %c0_37 = arith.constant 0 : index
        %96 = vector.load %arg7[%c0_36, %c0_37] : memref<1x8xf32, #tpu.memory_space<vmem>>, vector<1x8xf32>
        tpu.vector_store %arg7[%c0_36, %c0_37], %95 {strides = array<i32>} : memref<1x8xf32, #tpu.memory_space<vmem>>, vector<1x8xf32>,
        %97 = vector.shape_cast %67 : vector<8x1xf32> to vector<1x8x1xf32>
        %cst_38 = arith.constant dense<0.000000e+00> : vector<1xf32>
        %98 = vector.multi_reduction <add>, %97, %cst_38 [1, 2] : vector<1x8x1xf32> to vector<1xf32>
        %99 = vector.shape_cast %98 : vector<1xf32> to vector<1x1x1xf32>
        %100 = vector.extract %99[0, 0, 0] : f32 from vector<1x1x1xf32>
        %101 = vector.broadcast %100 : f32 to vector<1x1xf32>
        %102 = vector.shape_cast %95 : vector<1x8xf32> to vector<1x1x8xf32>
        %cst_39 = arith.constant dense<0.000000e+00> : vector<1xf32>
        %103 = vector.multi_reduction <add>, %102, %cst_39 [1, 2] : vector<1x1x8xf32> to vector<1xf32>
        %104 = vector.shape_cast %103 : vector<1xf32> to vector<1x1x1xf32>
        %105 = vector.extract %104[0, 0, 0] : f32 from vector<1x1x1xf32>
        %106 = vector.broadcast %105 : f32 to vector<1x1xf32>
        %107 = arith.addf %101, %106 : vector<1x1xf32>
        %cst_40 = arith.constant 0.000000e+00 : f32
        %108 = vector.broadcast %cst_40 : f32 to vector<1x1xf32>
        %109 = arith.subf %108, %107 : vector<1x1xf32>
        %110 = vector.broadcast %cst_20 : f32 to vector<1x1xf32>
        %111 = arith.mulf %109, %110 : vector<1x1xf32>
        %c0_41 = arith.constant 0 : index
        %c0_42 = arith.constant 0 : index
        %112 = vector.load %arg8[%c0_41, %c0_42] : memref<1x1xf32, #tpu.memory_space<vmem>>, vector<1x1xf32>
        tpu.vector_store %arg8[%c0_41, %c0_42], %111 {strides = array<i32>} : memref<1x1xf32, #tpu.memory_space<vmem>>, vector<1x1xf32>,
      } else {
      }
      %30 = arith.extui %26 : i1 to i32
      %cst_22 = arith.constant 0.670320034 : f32
      %cst_23 = arith.constant 1.250000e-01 : f32
      %c0_i32_24 = arith.constant 0 : i32
      %31 = arith.cmpi ne, %30, %c0_i32_24 : i32
      scf.if %31 {
        %c0_25 = arith.constant 0 : index
        %c0_26 = arith.constant 0 : index
        %32 = vector.load %arg2[%c0_25, %c0_26] : memref<8x1xi32, #tpu.memory_space<vmem>>, vector<8x1xi32>
        %c0_27 = arith.constant 0 : index
        %c0_28 = arith.constant 0 : index
        %33 = vector.load %arg3[%c0_27, %c0_28] : memref<1x8xi32, #tpu.memory_space<vmem>>, vector<1x8xi32>
        %34 = vector.broadcast %32 : vector<8x1xi32> to vector<8x8xi32>
        %35 = vector.broadcast %33 : vector<1x8xi32> to vector<8x8xi32>
        %36 = arith.cmpi eq, %34, %35 : vector<8x8xi32>
        %37 = arith.extui %36 : vector<8x8xi1> to vector<8x8xi32>
        %38 = arith.sitofp %37 : vector<8x8xi32> to vector<8x8xf32>
        %39 = vector.broadcast %18 : vector<8x1xf32> to vector<8x8xf32>
        %40 = arith.mulf %12, %39 : vector<8x8xf32>
        %41 = math.exp %40 : vector<8x8xf32>
        %cst_29 = arith.constant dense<0.000000e+00> : vector<8xf32>
        %42 = vector.multi_reduction <add>, %41, %cst_29 [1] : vector<8x8xf32> to vector<8xf32>
        %43 = vector.shape_cast %42 : vector<8xf32> to vector<8x1xf32>
        %44 = arith.mulf %38, %41 : vector<8x8xf32>
        %cst_30 = arith.constant dense<0.000000e+00> : vector<8xf32>
        %45 = vector.multi_reduction <add>, %44, %cst_30 [1] : vector<8x8xf32> to vector<8xf32>
        %46 = vector.shape_cast %45 : vector<8xf32> to vector<8x1xf32>
        %47 = vector.broadcast %cst_22 : f32 to vector<8x1xf32>
        %48 = arith.mulf %47, %46 : vector<8x1xf32>
        %49 = math.log %48 : vector<8x1xf32>
        %50 = arith.subf %43, %46 : vector<8x1xf32>
        %51 = arith.addf %48, %50 : vector<8x1xf32>
        %52 = math.log %51 : vector<8x1xf32>
        %53 = arith.subf %49, %52 : vector<8x1xf32>
        %c0_31 = arith.constant 0 : index
        %c0_32 = arith.constant 0 : index
        %54 = vector.load %arg6[%c0_31, %c0_32] : memref<8x1xf32, #tpu.memory_space<vmem>>, vector<8x1xf32>
        tpu.vector_store %arg6[%c0_31, %c0_32], %53 {strides = array<i32>} : memref<8x1xf32, #tpu.memory_space<vmem>>, vector<8x1xf32>,
        %55 = vector.broadcast %24 : vector<1x8xf32> to vector<8x8xf32>
        %56 = arith.mulf %12, %55 : vector<8x8xf32>
        %57 = math.exp %56 : vector<8x8xf32>
        %cst_33 = arith.constant dense<0.000000e+00> : vector<8xf32>
        %58 = vector.multi_reduction <add>, %57, %cst_33 [0] : vector<8x8xf32> to vector<8xf32>
        %59 = vector.shape_cast %58 : vector<8xf32> to vector<1x8xf32>
        %60 = arith.mulf %38, %57 : vector<8x8xf32>
        %cst_34 = arith.constant dense<0.000000e+00> : vector<8xf32>
        %61 = vector.multi_reduction <add>, %60, %cst_34 [0] : vector<8x8xf32> to vector<8xf32>
        %62 = vector.shape_cast %61 : vector<8xf32> to vector<1x8xf32>
        %63 = vector.broadcast %cst_22 : f32 to vector<1x8xf32>
        %64 = arith.mulf %63, %62 : vector<1x8xf32>
        %65 = math.log %64 : vector<1x8xf32>
        %66 = arith.subf %59, %62 : vector<1x8xf32>
        %67 = arith.addf %64, %66 : vector<1x8xf32>
        %68 = math.log %67 : vector<1x8xf32>
        %69 = arith.subf %65, %68 : vector<1x8xf32>
        %c0_35 = arith.constant 0 : index
        %c0_36 = arith.constant 0 : index
        %70 = vector.load %arg7[%c0_35, %c0_36] : memref<1x8xf32, #tpu.memory_space<vmem>>, vector<1x8xf32>
        tpu.vector_store %arg7[%c0_35, %c0_36], %69 {strides = array<i32>} : memref<1x8xf32, #tpu.memory_space<vmem>>, vector<1x8xf32>,
        %71 = vector.shape_cast %53 : vector<8x1xf32> to vector<1x8x1xf32>
        %cst_37 = arith.constant dense<0.000000e+00> : vector<1xf32>
        %72 = vector.multi_reduction <add>, %71, %cst_37 [1, 2] : vector<1x8x1xf32> to vector<1xf32>
        %73 = vector.shape_cast %72 : vector<1xf32> to vector<1x1x1xf32>
        %74 = vector.extract %73[0, 0, 0] : f32 from vector<1x1x1xf32>
        %75 = vector.broadcast %74 : f32 to vector<1x1xf32>
        %76 = vector.shape_cast %69 : vector<1x8xf32> to vector<1x1x8xf32>
        %cst_38 = arith.constant dense<0.000000e+00> : vector<1xf32>
        %77 = vector.multi_reduction <add>, %76, %cst_38 [1, 2] : vector<1x1x8xf32> to vector<1xf32>
        %78 = vector.shape_cast %77 : vector<1xf32> to vector<1x1x1xf32>
        %79 = vector.extract %78[0, 0, 0] : f32 from vector<1x1x1xf32>
        %80 = vector.broadcast %79 : f32 to vector<1x1xf32>
        %81 = arith.addf %75, %80 : vector<1x1xf32>
        %cst_39 = arith.constant 0.000000e+00 : f32
        %82 = vector.broadcast %cst_39 : f32 to vector<1x1xf32>
        %83 = arith.subf %82, %81 : vector<1x1xf32>
        %84 = vector.broadcast %cst_23 : f32 to vector<1x1xf32>
        %85 = arith.mulf %83, %84 : vector<1x1xf32>
        %c0_40 = arith.constant 0 : index
        %c0_41 = arith.constant 0 : index
        %86 = vector.load %arg8[%c0_40, %c0_41] : memref<1x1xf32, #tpu.memory_space<vmem>>, vector<1x1xf32>
        tpu.vector_store %arg8[%c0_40, %c0_41], %85 {strides = array<i32>} : memref<1x1xf32, #tpu.memory_space<vmem>>, vector<1x1xf32>,
      } else {
      }
    } else {
    }
    return
  }
  func.func @transform_0(%arg0: i32, %arg1: memref<1xi32, #tpu.memory_space<smem>>) -> (i32, i32) {
    %c0_i32 = arith.constant 0 : i32
    %c0_i32_0 = arith.constant 0 : i32
    %c0_i32_1 = arith.constant 0 : i32
    return %c0_i32, %c0_i32_0 : i32, i32
  }
  func.func @transform_1(%arg0: i32, %arg1: memref<1xi32, #tpu.memory_space<smem>>) -> (i32, i32) {
    %c0_i32 = arith.constant 0 : i32
    %c0_i32_0 = arith.constant 0 : i32
    %c0_i32_1 = arith.constant 0 : i32
    return %c0_i32, %c0_i32_0 : i32, i32
  }
  func.func @transform_2(%arg0: i32, %arg1: memref<1xi32, #tpu.memory_space<smem>>) -> (i32, i32) {
    %c0_i32 = arith.constant 0 : i32
    %c0_i32_0 = arith.constant 0 : i32
    return %c0_i32, %arg0 : i32, i32
  }
  func.func @transform_3(%arg0: i32, %arg1: memref<1xi32, #tpu.memory_space<smem>>) -> (i32, i32) {
    %c0_i32 = arith.constant 0 : i32
    %c0_i32_0 = arith.constant 0 : i32
    return %c0_i32, %arg0 : i32, i32
  }
  func.func @transform_4(%arg0: i32, %arg1: memref<1xi32, #tpu.memory_space<smem>>) -> (i32, i32) {
    %c0_i32 = arith.constant 0 : i32
    %c0_i32_0 = arith.constant 0 : i32
    %c0_i32_1 = arith.constant 0 : i32
    return %c0_i32, %c0_i32_0 : i32, i32
  }
  func.func @transform_5(%arg0: i32, %arg1: memref<1xi32, #tpu.memory_space<smem>>) -> (i32, i32) {
    %c0_i32 = arith.constant 0 : i32
    %c0_i32_0 = arith.constant 0 : i32
    %c0_i32_1 = arith.constant 0 : i32
    return %c0_i32, %c0_i32_0 : i32, i32
  }
  func.func @transform_6(%arg0: i32, %arg1: memref<1xi32, #tpu.memory_space<smem>>) -> (i32, i32) {
    %c0_i32 = arith.constant 0 : i32
    %c0_i32_0 = arith.constant 0 : i32
    %c0_i32_1 = arith.constant 0 : i32
    return %c0_i32, %c0_i32_0 : i32, i32
  }
}

</mosaic_0001>

<llo_original>
// kernel: tpu_custom_call.1
$region0: #{tpu_custom_call.1}
  #allocation0 [shape = 'u32[]', space=smem, size = 0x4, offset = 0x4, fixed_abs, tag = 'smem constant byte address 0x4 - core index']
  #allocation1 [shape = 'u32[144,128]{1,0:T(1,128)}', space=vmem, size = 0x12000, scoped, tag = 'internal scratch']
  #allocation2 [shape = 'f32[8,8]{1,0:T(8,128)}', space=vmem, size = 0x1000, scoped, tag = 'scratch operand']
  #allocation3 [shape = 's32[1]{0}', space=sflag, size = 0x4, scoped, tag = 'scoped memory for tpu_custom_call.1']
  #allocation4 [shape = 's32[1]{0:T(128)S(6)}', space=smem, size = 0x200, scoped, tag = 'prefetched SMEM operand 0']
  %s0 = inlined_call_operand.<no memory space> [shape: s32[1], index: 0, kind: input, shape index: {}]
  %s1 = inlined_call_operand.vmem [shape: s32[8,1], index: 1, kind: input, shape index: {}]
  %s2 = inlined_call_operand.hbm [shape: s32[1,8], index: 2, kind: input, shape index: {}]
  %s3 = inlined_call_operand.vmem [shape: bf16[8,384], index: 3, kind: input, shape index: {}]
  %s4 = inlined_call_operand.vmem [shape: bf16[8,384], index: 4, kind: input, shape index: {}]
  %s5 = inlined_call_operand.vmem [shape: f32[8,1], index: 5, kind: output, shape index: {0}]
  %s6 = inlined_call_operand.hbm [shape: f32[1,8], index: 6, kind: output, shape index: {1}]
  %s7 = inlined_call_operand.hbm [shape: f32[1,1], index: 7, kind: output, shape index: {2}]
  %8 = xla_tuple %s5, %s6, %s7
  %s9 = sld [smem:[#allocation0]]
  $region62: #{tpu_custom_call.1} parent=0
    _
  %s11 = ssub.s32 1, %s9
  %s12 = scalar_select 0, %s11, %s9
  %13 = sst [smem:[#allocation4]] %s0
  $region1: #{tpu_custom_call.1} parent=0
    #allocation5 [shape = 'u8[512]{0}', space=vmem, size = 0x400, scoped, tag = 'input window, operand 2, single buffered']
    #allocation6 [shape = 's32[1]{0}', space=sflag, size = 0x4, scoped, tag = 'scoped memory for tpu_custom_call.1']
    #allocation7 [shape = 's32[1]{0}', space=sflag, size = 0x4, scoped, tag = 'scoped memory for tpu_custom_call.1']
    #allocation8 [shape = 'u8[512]{0}', space=vmem, size = 0x400, scoped, tag = 'output window, operand 1, single buffered']
    #allocation9 [shape = 'u8[512]{0}', space=vmem, size = 0x400, scoped, tag = 'output window, operand 2, single buffered']
    #allocation10 [shape = 's32[1]{0}', space=sflag, size = 0x4, scoped, tag = 'scoped memory for tpu_custom_call.1']
    %14 = vsyncpa [#allocation6], 0
    %15 = vsyncpa [#allocation7], 0
    %16 = vsyncpa [#allocation10], 0
    // Predicated region
    $region2: #{tpu_custom_call.1} parent=1 // pred_check
      _
    $region3: #{tpu_custom_call.1} parent=1 // pred_check_branch
      %18 = sbr.rel (0) target = $region5
    $region4: #{tpu_custom_call.1} parent=1 // pred_region
      _
    $region5: #{tpu_custom_call.1} parent=1 // pred_fallthru
      _
    // Predicated region
    $region6: #{tpu_custom_call.1} parent=1 // pred_check
      _
    $region7: #{tpu_custom_call.1} parent=1 // pred_check_branch
      %20 = sbr.rel (0) target = $region9
    $region8: #{tpu_custom_call.1} parent=1 // pred_region
      %s22 = ssub.s32 16, 16
      %23 = vsyncadd [#allocation6], %s22
      %s25 = sshll.u32 [#allocation5], 4
      %s26 = int_to_ptr.vmem [resolvable:$true] %s25
      %28 = dma.hbm_to_vmem [thread:$0]  %s2, 16, %s26, [#allocation6]
    $region9: #{tpu_custom_call.1} parent=1 // pred_fallthru
      _
    // Predicated region
    $region10: #{tpu_custom_call.1} parent=1 // pred_check
      _
    $region11: #{tpu_custom_call.1} parent=1 // pred_check_branch
      %30 = sbr.rel (0) target = $region13
    $region12: #{tpu_custom_call.1} parent=1 // pred_region
      _
    $region13: #{tpu_custom_call.1} parent=1 // pred_fallthru
      _
    // Predicated region
    $region14: #{tpu_custom_call.1} parent=1 // pred_check
      _
    $region15: #{tpu_custom_call.1} parent=1 // pred_check_branch
      %32 = sbr.rel (0) target = $region17
    $region16: #{tpu_custom_call.1} parent=1 // pred_region
      _
    $region17: #{tpu_custom_call.1} parent=1 // pred_fallthru
      _
    // Predicated region
    $region18: #{tpu_custom_call.1} parent=1 // pred_check
      _
    $region19: #{tpu_custom_call.1} parent=1 // pred_check_branch
      %34 = sbr.rel (0) target = $region21
    $region20: #{tpu_custom_call.1} parent=1 // pred_region
      %35 = dma.done [#allocation6], 16
    $region21: #{tpu_custom_call.1} parent=1 // pred_fallthru
      _
    %p37 = scmp.eq.s32.totalorder 0, 0
    // Predicated region
    $region22: #{tpu_custom_call.1} parent=1 // pred_check
      %p38 = pneg %p37
    $region23: #{tpu_custom_call.1} parent=1 // pred_check_branch
      %40 = sbr.rel (%p38) target = $region25
    $region24: #{tpu_custom_call.1} parent=1 // pred_region
      %vm41 = vcmask 64512
      %42 = vst.msk [vmem:[#allocation2] sm:$0xff] %vm41, 0.0
    $region25: #{tpu_custom_call.1} parent=1 // pred_fallthru
      _
    %v43 = vld [vmem:[#allocation2] sm:$0xff]
    %v44 = vld [vmem:[%s3] sm:$0xff]
    %v45 = vld [vmem:[%s3 + $0x8] sm:$0xf]
    %v46 = vld [vmem:[%s4] sm:$0xff]
    %v47 = vld [vmem:[%s4 + $0x8] sm:$0xf]
    %v50 = vunpack.c.l.b16 %v44
    %v51 = vunpack.c.h.b16 %v44
    %v52 = vunpack.c.l.b16 %v45
    %v53 = vpack.c.b16 %v50, %v50
    %v54 = vpack.c.b16 %v51, %v51
    %v55 = vpack.c.b16 %v52, %v52
    %v61 = vunpack.c.l.b16 %v46
    %v62 = vunpack.c.h.b16 %v46
    %v63 = vunpack.c.l.b16 %v47
    %v64 = vpack.c.b16 %v61, %v61
    %v65 = vpack.c.b16 %v62, %v62
    %v66 = vpack.c.b16 %v63, %v63
    %70 = vmatprep.subr.bf16.mxu0 %v65
    %71 = vmatpush1.bf16.xpose.msra.mxu0 %v64
    %72 = vmatprep.subr.bf16.mxu0 0
    %73 = vmatpush1.bf16.xpose.msra.mxu0 0
    %74 = vmatprep.subr.bf16.mxu0 0
    %75 = vmatpush1.bf16.xpose.msra.mxu0 0
    %76 = vmatprep.subr.bf16.mxu0 0
    %77 = vmatpush1.bf16.xpose.msra.mxu0 0
    %78 = vmatprep.subr.bf16.mxu0 0
    %79 = vmatpush1.bf16.xpose.msra.mxu0 0
    %80 = vmatprep.subr.bf16.mxu0 0
    %81 = vmatpush1.bf16.xpose.msra.mxu0 0
    %82 = vmatprep.subr.bf16.mxu0 0
    %83 = vmatpush1.bf16.xpose.msra.mxu0 0
    %84 = vmatprep.subr.bf16.mxu0 0
    %85 = vmatpush1.bf16.xpose.msra.mxu0 0
    %86 = vmatprep.subr.bf16.mxu0 0
    %87 = vmatpush1.bf16.xpose.msra.mxu0 0
    %88 = vmatprep.subr.bf16.mxu0 0
    %89 = vmatpush1.bf16.xpose.msra.mxu0 0
    %90 = vmatprep.subr.bf16.mxu0 0
    %91 = vmatpush1.bf16.xpose.msra.mxu0 0
    %92 = vmatprep.subr.bf16.mxu0 0
    %93 = vmatpush1.bf16.xpose.msra.mxu0 0
    %94 = vmatprep.subr.bf16.mxu0 0
    %95 = vmatpush1.bf16.xpose.msra.mxu0 0
    %96 = vmatprep.subr.bf16.mxu0 0
    %97 = vmatpush1.bf16.xpose.msra.mxu0 0
    %98 = vmatprep.subr.bf16.mxu0 0
    %99 = vmatpush1.bf16.xpose.msra.mxu0 0
    %100 = vmatprep.subr.bf16.mxu0 0
    %101 = vmatpush1.bf16.xpose.msra.mxu0 0
    %102 = vmatprep.mubr.bf16.mxu0 %v54
    %103 = vmatmul.mubr.bf16.gmra.mrb[0].mxu0 %v53
    %v104 = vpop.f32.mrb[0].mxu0
    %v105 = vadd.f32 0.0, %v104
    %v106 = vpop.f32.mrb[0].mxu0
    %v107 = vpop.f32.mrb[0].mxu0
    %v108 = vpop.f32.mrb[0].mxu0
    %109 = vdwg.mxu0
    %110 = vmatprep.subr.bf16.mxu0 0
    %111 = vmatpush1.bf16.xpose.msra.mxu0 %v66
    %112 = vmatprep.subr.bf16.mxu0 0
    %113 = vmatpush1.bf16.xpose.msra.mxu0 0
    %114 = vmatprep.subr.bf16.mxu0 0
    %115 = vmatpush1.bf16.xpose.msra.mxu0 0
    %116 = vmatprep.subr.bf16.mxu0 0
    %117 = vmatpush1.bf16.xpose.msra.mxu0 0
    %118 = vmatprep.subr.bf16.mxu0 0
    %119 = vmatpush1.bf16.xpose.msra.mxu0 0
    %120 = vmatprep.subr.bf16.mxu0 0
    %121 = vmatpush1.bf16.xpose.msra.mxu0 0
    %122 = vmatprep.subr.bf16.mxu0 0
    %123 = vmatpush1.bf16.xpose.msra.mxu0 0
    %124 = vmatprep.subr.bf16.mxu0 0
    %125 = vmatpush1.bf16.xpose.msra.mxu0 0
    %126 = vmatprep.subr.bf16.mxu0 0
    %127 = vmatpush1.bf16.xpose.msra.mxu0 0
    %128 = vmatprep.subr.bf16.mxu0 0
    %129 = vmatpush1.bf16.xpose.msra.mxu0 0
    %130 = vmatprep.subr.bf16.mxu0 0
    %131 = vmatpush1.bf16.xpose.msra.mxu0 0
    %132 = vmatprep.subr.bf16.mxu0 0
    %133 = vmatpush1.bf16.xpose.msra.mxu0 0
    %134 = vmatprep.subr.bf16.mxu0 0
    %135 = vmatpush1.bf16.xpose.msra.mxu0 0
    %136 = vmatprep.subr.bf16.mxu0 0
    %137 = vmatpush1.bf16.xpose.msra.mxu0 0
    %138 = vmatprep.subr.bf16.mxu0 0
    %139 = vmatpush1.bf16.xpose.msra.mxu0 0
    %140 = vmatprep.subr.bf16.mxu0 0
    %141 = vmatpush1.bf16.xpose.msra.mxu0 0
    %142 = vmatprep.mubr.bf16.mxu0 0
    %143 = vmatmul.mubr.bf16.gmra.mrb[0].mxu0 %v55
    %v144 = vpop.f32.mrb[0].mxu0
    %v145 = vadd.f32 %v105, %v144
    %v146 = vpop.f32.mrb[0].mxu0
    %v147 = vpop.f32.mrb[0].mxu0
    %v148 = vpop.f32.mrb[0].mxu0
    %149 = vdwg.mxu0
    %v150 = vadd.f32 %v43, %v145
    %vm151 = vcmask 64512
    %152 = vst.msk [vmem:[#allocation2] sm:$0xff] %vm151, %v150
    // Predicated region
    $region26: #{tpu_custom_call.1} parent=1 // pred_check
      %p153 = pneg %p37
    $region27: #{tpu_custom_call.1} parent=1 // pred_check_branch
      %155 = sbr.rel (%p153) target = $region29
    $region28: #{tpu_custom_call.1} parent=1 // pred_region
      %v156 = vld [vmem:[#allocation2] sm:$0xff]
      %v157 = vmul.f32 %v156, %v156
      %v158 = vsel %vm151, %v157, 0.0
      %159 = vadd.xlane.f32.xlu0 %v158
      %v160 = vpop.xlane.xlu0 %159
      %v161 = vmax.f32 %v160, 1e-24
      %v162 = vrsqrt.pop %v161
      %v163 = vrot.slane %v158, 4
      %v164 = vadd.f32 %v158, %v163
      %v165 = vrot.slane %v164, 2
      %v166 = vadd.f32 %v164, %v165
      %v167 = vrot.slane %v166, 1
      %v168 = vadd.f32 %v166, %v167
      %v169 = vmax.f32 %v168, 1e-24
      %v170 = vrsqrt.pop %v169
      %s171 = sld [smem:[#allocation4]]
      %p172 = scmp.ne.s32.totalorder %s171, 0
      %p173 = scmp.eq.s32.totalorder %s171, 0
      // Predicated region
      $region30: #{tpu_custom_call.1} parent=28 // pred_check
        %p174 = pneg %p173
      $region31: #{tpu_custom_call.1} parent=28 // pred_check_branch
        %176 = sbr.rel (%p174) target = $region33
      $region32: #{tpu_custom_call.1} parent=28 // pred_region
        %v177 = vlaneseq
        %v178 = vshrl.u32 %v177, 7
        %v179 = vlaneseq
        %v180 = vand.u32 %v179, 127
        %vm181 = vcmp.eq.s32.totalorder %v178, %v180
        %v182 = vsel %vm181, %v156, 0.0
        %v183 = vsel %vm151, %v182, 0.0
        %184 = vadd.xlane.f32.xlu0 %v183
        %v185 = vpop.xlane.xlu0 %184
        %v186 = vrot.slane %v183, 4
        %v187 = vadd.f32 %v183, %v186
        %v188 = vrot.slane %v187, 2
        %v189 = vadd.f32 %v187, %v188
        %v190 = vrot.slane %v189, 1
        %v191 = vadd.f32 %v189, %v190
        %v192 = vmul.f32 %v156, %v162
        %v193 = vmul.f32 %v185, %v162
        %v194 = vsub.f32 %v193, 0.4
        %v195 = vsel %vm151, %v192, -inf
        %196 = vmax.xlane.f32.xlu0 %v195
        %v197 = vpop.xlane.xlu0 %196
        %v198 = vmax.f32 %v194, %v197
        %v199 = vsub.f32 %v192, %v198
        %v200 = vmul.f32 %v199, 1.442695
        %v201 = vpow.pop %v200
        %v202 = vsel %vm181, 0.0, %v201
        %v203 = vsel %vm151, %v202, 0.0
        %204 = vadd.xlane.f32.xlu0 %v203
        %v205 = vpop.xlane.xlu0 %204
        %v206 = vsub.f32 %v194, %v198
        %v207 = vmul.f32 %v206, 1.442695
        %v208 = vpow.pop %v207
        %v209 = vadd.f32 %v208, %v205
        %v210 = vlog2.pop %v209
        %v211 = vmul.f32 %v210, 0.6931472
        %v212 = vsub.f32 %v206, %v211
        %vm213 = vcmask 7168
        %214 = vst.msk [vmem:[%s5] sm:$0xff] %vm213, %v212
        %v215 = vmul.f32 %v156, %v170
        %v216 = vmul.f32 %v191, %v170
        %v217 = vsub.f32 %v216, 0.4
        %v218 = vsel %vm151, %v215, -inf
        %v219 = vrot.slane %v218, 4
        %v220 = vmax.f32 %v218, %v219
        %v221 = vrot.slane %v220, 2
        %v222 = vmax.f32 %v220, %v221
        %v223 = vrot.slane %v222, 1
        %v224 = vmax.f32 %v222, %v223
        %v225 = vmax.f32 %v217, %v224
        %v226 = vsub.f32 %v215, %v225
        %v227 = vmul.f32 %v226, 1.442695
        %v228 = vpow.pop %v227
        %v229 = vsel %vm181, 0.0, %v228
        %v230 = vsel %vm151, %v229, 0.0
        %v231 = vrot.slane %v230, 4
        %v232 = vadd.f32 %v230, %v231
        %v233 = vrot.slane %v232, 2
        %v234 = vadd.f32 %v232, %v233
        %v235 = vrot.slane %v234, 1
        %v236 = vadd.f32 %v234, %v235
        %v237 = vsub.f32 %v217, %v225
        %v238 = vmul.f32 %v237, 1.442695
        %v239 = vpow.pop %v238
        %v240 = vadd.f32 %v239, %v236
        %v241 = vlog2.pop %v240
        %v242 = vmul.f32 %v241, 0.6931472
        %v243 = vsub.f32 %v237, %v242
        %vm244 = vcmask 57344
        %245 = vst.msk [vmem:[#allocation8] sm:$0x1] %vm244, %v243
        %v246 = vsel %vm213, %v212, 0.0
        %247 = vadd.xlane.f32.xlu0 %v246
        %v248 = vpop.xlane.xlu0 %247
        %v249 = vrot.slane %v248, 4
        %v250 = vadd.f32 %v248, %v249
        %v251 = vrot.slane %v250, 2
        %v252 = vadd.f32 %v250, %v251
        %v253 = vrot.slane %v252, 1
        %v254 = vadd.f32 %v252, %v253
        %s255 = vtos %v254
        %v256 = vstv %s255
        %v257 = vsel %vm244, %v243, 0.0
        %258 = vadd.xlane.f32.xlu0 %v257
        %v259 = vpop.xlane.xlu0 %258
        %v260 = vrot.slane %v259, 4
        %v261 = vadd.f32 %v259, %v260
        %v262 = vrot.slane %v261, 2
        %v263 = vadd.f32 %v261, %v262
        %v264 = vrot.slane %v263, 1
        %v265 = vadd.f32 %v263, %v264
        %s266 = vtos %v265
        %v267 = vstv %s266
        %v268 = vadd.f32 %v256, %v267
        %v269 = vsub.f32 0.0, %v268
        %v270 = vmul.f32 %v269, 0.125
        %vm271 = vcmask 0
        %272 = vst.msk [vmem:[#allocation9] sm:$0x1] %vm271, %v270
      $region33: #{tpu_custom_call.1} parent=28 // pred_fallthru
        _
      // Predicated region
      $region34: #{tpu_custom_call.1} parent=28 // pred_check
        %p273 = pneg %p172
      $region35: #{tpu_custom_call.1} parent=28 // pred_check_branch
        %275 = sbr.rel (%p273) target = $region37
      $region36: #{tpu_custom_call.1} parent=28 // pred_region
        %v276 = vld [vmem:[%s1] sm:$0xff]
        %v277 = vld [vmem:[#allocation5] sm:$0x1]
        %278 = vset.pattern.permute.xlu0 0
        %279 = vperm.xlu0 %278, %v276
        %v280 = vpop.permute.xlu0 %279
        %v281 = vlaneseq
        %v282 = vshrl.u32 %v281, 7
        %v283 = vsub.s32 0, %v282
        %v284 = vrot.slane %v277, %v283
        %vm285 = vcmp.eq.s32.totalorder %v280, %v284
        %v286 = vsel %vm285, 1, 0
        %v287 = vcvt.s32.f32 %v286
        %v288 = vmul.f32 %v156, %v162
        %v289 = vmul.f32 %v288, 1.442695
        %v290 = vpow.pop %v289
        %v291 = vsel %vm151, %v290, 0.0
        %292 = vadd.xlane.f32.xlu0 %v291
        %v293 = vpop.xlane.xlu0 %292
        %v294 = vmul.f32 %v287, %v290
        %v295 = vsel %vm151, %v294, 0.0
        %296 = vadd.xlane.f32.xlu0 %v295
        %v297 = vpop.xlane.xlu0 %296
        %v298 = vmul.f32 %v297, 0.67032003
        %v299 = vlog2.pop %v298
        %v300 = vmul.f32 %v299, 0.6931472
        %v301 = vsub.f32 %v293, %v297
        %v302 = vadd.f32 %v298, %v301
        %v303 = vlog2.pop %v302
        %v304 = vmul.f32 %v303, 0.6931472
        %v305 = vsub.f32 %v300, %v304
        %vm306 = vcmask 7168
        %307 = vst.msk [vmem:[%s5] sm:$0xff] %vm306, %v305
        %v308 = vmul.f32 %v156, %v170
        %v309 = vmul.f32 %v308, 1.442695
        %v310 = vpow.pop %v309
        %v311 = vsel %vm151, %v310, 0.0
        %v312 = vrot.slane %v311, 4
        %v313 = vadd.f32 %v311, %v312
        %v314 = vrot.slane %v313, 2
        %v315 = vadd.f32 %v313, %v314
        %v316 = vrot.slane %v315, 1
        %v317 = vadd.f32 %v315, %v316
        %v318 = vmul.f32 %v287, %v310
        %v319 = vsel %vm151, %v318, 0.0
        %v320 = vrot.slane %v319, 4
        %v321 = vadd.f32 %v319, %v320
        %v322 = vrot.slane %v321, 2
        %v323 = vadd.f32 %v321, %v322
        %v324 = vrot.slane %v323, 1
        %v325 = vadd.f32 %v323, %v324
        %v326 = vmul.f32 %v325, 0.67032003
        %v327 = vlog2.pop %v326
        %v328 = vmul.f32 %v327, 0.6931472
        %v329 = vsub.f32 %v317, %v325
        %v330 = vadd.f32 %v326, %v329
        %v331 = vlog2.pop %v330
        %v332 = vmul.f32 %v331, 0.6931472
        %v333 = vsub.f32 %v328, %v332
        %vm334 = vcmask 57344
        %335 = vst.msk [vmem:[#allocation8] sm:$0x1] %vm334, %v333
        %v336 = vsel %vm306, %v305, 0.0
        %337 = vadd.xlane.f32.xlu0 %v336
        %v338 = vpop.xlane.xlu0 %337
        %v339 = vrot.slane %v338, 4
        %v340 = vadd.f32 %v338, %v339
        %v341 = vrot.slane %v340, 2
        %v342 = vadd.f32 %v340, %v341
        %v343 = vrot.slane %v342, 1
        %v344 = vadd.f32 %v342, %v343
        %s345 = vtos %v344
        %v346 = vstv %s345
        %v347 = vsel %vm334, %v333, 0.0
        %348 = vadd.xlane.f32.xlu0 %v347
        %v349 = vpop.xlane.xlu0 %348
        %v350 = vrot.slane %v349, 4
        %v351 = vadd.f32 %v349, %v350
        %v352 = vrot.slane %v351, 2
        %v353 = vadd.f32 %v351, %v352
        %v354 = vrot.slane %v353, 1
        %v355 = vadd.f32 %v353, %v354
        %s356 = vtos %v355
        %v357 = vstv %s356
        %v358 = vadd.f32 %v346, %v357
        %v359 = vsub.f32 0.0, %v358
        %v360 = vmul.f32 %v359, 0.125
        %vm361 = vcmask 0
        %362 = vst.msk [vmem:[#allocation9] sm:$0x1] %vm361, %v360
      $region37: #{tpu_custom_call.1} parent=28 // pred_fallthru
        _
    $region29: #{tpu_custom_call.1} parent=1 // pred_fallthru
      _
    // Predicated region
    $region38: #{tpu_custom_call.1} parent=1 // pred_check
      _
    $region39: #{tpu_custom_call.1} parent=1 // pred_check_branch
      %364 = sbr.rel (0) target = $region41
    $region40: #{tpu_custom_call.1} parent=1 // pred_region
      _
    $region41: #{tpu_custom_call.1} parent=1 // pred_fallthru
      _
    // Predicated region
    $region42: #{tpu_custom_call.1} parent=1 // pred_check
      _
    $region43: #{tpu_custom_call.1} parent=1 // pred_check_branch
      %366 = sbr.rel (0) target = $region45
    $region44: #{tpu_custom_call.1} parent=1 // pred_region
      %s368 = ssub.s32 16, 16
      %369 = vsyncadd [#allocation7], %s368
      %s371 = sshll.u32 [#allocation8], 4
      %s372 = int_to_ptr.vmem [resolvable:$true] %s371
      %374 = dma.vmem_to_hbm [thread:$0]  %s372, 16, %s6, [#allocation7]
    $region45: #{tpu_custom_call.1} parent=1 // pred_fallthru
      _
    // Predicated region
    $region46: #{tpu_custom_call.1} parent=1 // pred_check
      _
    $region47: #{tpu_custom_call.1} parent=1 // pred_check_branch
      %376 = sbr.rel (0) target = $region49
    $region48: #{tpu_custom_call.1} parent=1 // pred_region
      %s378 = ssub.s32 16, 16
      %379 = vsyncadd [#allocation10], %s378
      %s381 = sshll.u32 [#allocation9], 4
      %s382 = int_to_ptr.vmem [resolvable:$true] %s381
      %384 = dma.vmem_to_hbm [thread:$0]  %s382, 16, %s7, [#allocation10]
    $region49: #{tpu_custom_call.1} parent=1 // pred_fallthru
      _
    // Predicated region
    $region50: #{tpu_custom_call.1} parent=1 // pred_check
      _
    $region51: #{tpu_custom_call.1} parent=1 // pred_check_branch
      %386 = sbr.rel (0) target = $region53
    $region52: #{tpu_custom_call.1} parent=1 // pred_region
      _
    $region53: #{tpu_custom_call.1} parent=1 // pred_fallthru
      _
    // Predicated region
    $region54: #{tpu_custom_call.1} parent=1 // pred_check
      _
    $region55: #{tpu_custom_call.1} parent=1 // pred_check_branch
      %388 = sbr.rel (0) target = $region57
    $region56: #{tpu_custom_call.1} parent=1 // pred_region
      %389 = dma.done [#allocation7], 16
    $region57: #{tpu_custom_call.1} parent=1 // pred_fallthru
      _
    // Predicated region
    $region58: #{tpu_custom_call.1} parent=1 // pred_check
      _
    $region59: #{tpu_custom_call.1} parent=1 // pred_check_branch
      %391 = sbr.rel (0) target = $region61
    $region60: #{tpu_custom_call.1} parent=1 // pred_region
      %392 = dma.done [#allocation10], 16
    $region61: #{tpu_custom_call.1} parent=1 // pred_fallthru
      _
    %393 = vsyncpa [#allocation6], 1
    %394 = vsyncpa [#allocation7], 1
    %395 = vsyncpa [#allocation10], 1

</llo_original>
